<compile_context>
chip_gen: v7x
topology: tpu7x:2x2x1
jax: 0.10.0
libtpu: 0.0.40
codegen_flags: <defaults>
</compile_context>

<pallas_src>
import functools

import jax
import jax.numpy as jnp
from jax.experimental import pallas as pl
from jax.experimental.pallas import tpu as pltpu

EPS = 1e-6


def _final_layer_kernel(x_ref, a_ref, s_ref, w_ref, bias_ref, o_ref):
    # x_ref:    (1, TN, H)   bf16 activation tile (streamed from HBM)
    # a_ref:    (1, 1, H)    f32 scale_eff = gamma * (1 + scale)   (per-batch, resident)
    # s_ref:    (1, 1, H)    f32 shift_eff = beta * (1 + scale) + shift
    # w_ref:    (H, CP)      bf16 projection weight, lane-padded
    # bias_ref: (1, CP)      f32 projection bias, lane-padded
    # o_ref:    (1, TN, CP)  bf16 lane-dense output tile
    x = x_ref[0].astype(jnp.float32)                          # (TN, H)
    h_inv = 1.0 / x.shape[-1]

    # One-pass LayerNorm statistics in f32 (biased variance, eps inside rsqrt).
    mean = jnp.sum(x, axis=-1, keepdims=True) * h_inv         # (TN, 1)
    ex2 = jnp.sum(x * x, axis=-1, keepdims=True) * h_inv
    var = jnp.maximum(ex2 - mean * mean, 0.0)
    inv = jax.lax.rsqrt(var + EPS)                            # (TN, 1)

    # normalize + (folded LN affine + t2i_modulate), single cast to the bf16 operand.
    mod = ((x - mean) * (inv * a_ref[0]) + s_ref[0]).astype(jnp.bfloat16)   # (TN, H)

    # Projection on the MXU: bf16 operands, f32 accumulation, lane-dense store.
    out = jnp.dot(mod, w_ref[...], preferred_element_type=jnp.float32) + bias_ref[...]
    o_ref[0] = out.astype(o_ref.dtype)


def _pad_out_channels(c):
    cp = ((c + 127) // 128) * 128
    if cp > 128:
        cp = ((cp + 255) // 256) * 256     # full-width MXU pushes on v6e/v7x (2x256x256)
    return cp


def _pick_token_tile(n, batch, target=512):
    """Return (TN, padded_N). TN is a multiple of 8 (or == n) and <= target."""
    if n <= target:
        return n, n
    best = 0
    for t in range(8, target + 1, 8):
        if n % t == 0:
            best = t
    if best < 128:
        # No decent divisor: pad tokens to a multiple of 256 instead of making the
        # whole sequence VMEM-resident or running tiny (overhead-bound) tiles.
        tn = 256
        return tn, ((n + tn - 1) // tn) * tn
    tn = best
    # v7x has 2 TensorCores: keep the parallel grid extent even when B == 1.
    if batch == 1 and (n // tn) % 2 == 1 and tn % 16 == 0:
        tn //= 2
    return tn, n


def _vmem_limit_bytes():
    try:
        cap = pltpu.get_tpu_info().vmem_capacity_bytes
    except Exception:
        cap = 64 * 1024 * 1024             # conservative default (v7x per-TC VMEM)
    return (int(cap) * 3) // 4


def prepare_params(params):
    """One-time parameter prep: bf16 cast + lane padding of the projection weights."""
    w_lin = params["w_lin"]                    # (H, C)
    b_lin = params["b_lin"].reshape(1, -1)     # (1, C)
    H, C = w_lin.shape
    CP = _pad_out_channels(C)
    w_pad = jnp.zeros((H, CP), jnp.bfloat16).at[:, :C].set(w_lin.astype(jnp.bfloat16))
    b_pad = jnp.zeros((1, CP), jnp.float32).at[:, :C].set(b_lin.astype(jnp.float32))
    out = dict(params)
    out["w_lin_pad"] = w_pad
    out["b_lin_pad"] = b_pad
    return out


@functools.partial(jax.jit, static_argnames=("out_channels", "unpad"))
def final_layer(x, c, params, *, out_channels, unpad=True):
    """x: (B, N, H), c: (B, 1, H) -> (B, N, C) bf16. Same forward as PyTorch FinalLayer."""
    B, N, H = x.shape
    C = out_channels
    w_pad = params["w_lin_pad"]                # (H, CP) bf16, prepared once
    b_pad = params["b_lin_pad"]                # (1, CP) f32
    CP = w_pad.shape[1]

    # Keep x bf16 end-to-end: the kernel is HBM-bound on reading x.
    if x.dtype != jnp.bfloat16:
        x = x.astype(jnp.bfloat16)

    # ---- adaLN branch outside the kernel (tiny M=B matmul) + LayerNorm-affine fold ----
    c2d = c.reshape(B, H).astype(jnp.float32)
    silu_c = c2d * jax.nn.sigmoid(c2d)
    shift = silu_c @ params["w_shift"] + params["b_shift"]                      # (B, H)
    scale = silu_c @ params["w_scale"] + params["b_scale"]                      # (B, H)
    scale_eff = (params["gamma"] * (1.0 + scale)).astype(jnp.float32).reshape(B, 1, H)
    shift_eff = (params["beta"] * (1.0 + scale) + shift).astype(jnp.float32).reshape(B, 1, H)

    # ---- token tiling (capped at 512; pad awkward N instead of going resident) ----
    TN, N_pad = _pick_token_tile(N, B)
    if N_pad != N:
        x = jnp.pad(x, ((0, 0), (0, N_pad - N), (0, 0)))
    grid = (B, N_pad // TN)

    out_padded = pl.pallas_call(
        _final_layer_kernel,
        out_shape=jax.ShapeDtypeStruct((B, N_pad, CP), jnp.bfloat16),
        grid_spec=pltpu.PrefetchScalarGridSpec(
            num_scalar_prefetch=0,
            grid=grid,
            in_specs=[
                pl.BlockSpec((1, TN, H), lambda b, j: (b, j, 0)),   # x tile (streamed)
                pl.BlockSpec((1, 1, H), lambda b, j: (b, 0, 0)),    # scale_eff
                pl.BlockSpec((1, 1, H), lambda b, j: (b, 0, 0)),    # shift_eff
                pl.BlockSpec((H, CP), lambda b, j: (0, 0)),         # projection weight
                pl.BlockSpec((1, CP), lambda b, j: (0, 0)),         # projection bias
            ],
            out_specs=pl.BlockSpec((1, TN, CP), lambda b, j: (b, j, 0)),
        ),
        compiler_params=pltpu.CompilerParams(
            dimension_semantics=("parallel", "parallel"),
            vmem_limit_bytes=_vmem_limit_bytes(),
        ),
    )(x, scale_eff, shift_eff, w_pad, b_pad)

    if not unpad:
        # Lane-dense padded slab: fuse the [..., :C] slice into downstream ops
        # (e.g. the unpatchify reshape) to avoid a second HBM copy.
        return out_padded
    # TODO(synk): in production prefer unpad=False and fuse this slice downstream.
    if N_pad != N:
        return out_padded[:, :N, :C]
    return out_padded[..., :C]


def init_params(key, hidden_size, out_channels):
    """Deterministic synthetic parameters matching the PyTorch module shapes."""
    ks = jax.random.split(key, 4)
    # nn.LayerNorm(hidden_size, elementwise_affine=True)
    gamma = jnp.ones((1, hidden_size), jnp.float32)
    beta = jnp.zeros((1, hidden_size), jnp.float32)
    # nn.Linear(hidden_size, out_channels): weight (C, H), bias (C,)
    w_lin_t = jax.random.normal(ks[0], (out_channels, hidden_size), jnp.float32) * 0.02
    b_lin = jax.random.normal(ks[1], (out_channels,), jnp.float32) * 0.02
    # adaLN Linear(hidden_size, 2*hidden_size): weight (2H, H), bias (2H,)
    w_ada_t = jax.random.normal(ks[2], (2 * hidden_size, hidden_size), jnp.float32) * 0.02
    b_ada = jax.random.normal(ks[3], (2 * hidden_size,), jnp.float32) * 0.02

    H = hidden_size
    return {
        "gamma": gamma,
        "beta": beta,
        # chunk(2, dim=-1): first H outputs = shift, next H = scale
        "w_shift": w_ada_t[:H, :].T,                       # (H, H)
        "b_shift": b_ada[:H].reshape(1, H),
        "w_scale": w_ada_t[H:, :].T,                       # (H, H)
        "b_scale": b_ada[H:].reshape(1, H),
        "w_lin": w_lin_t.T,                                # (H, C)
        "b_lin": b_lin.reshape(1, out_channels),
    }


def reference(x, c, p):
    """Pure-JAX f32 reference of the PyTorch forward."""
    x = x.astype(jnp.float32)
    c = c.astype(jnp.float32)
    silu_c = c * jax.nn.sigmoid(c)
    shift = silu_c @ p["w_shift"] + p["b_shift"]
    scale = silu_c @ p["w_scale"] + p["b_scale"]
    mean = jnp.mean(x, axis=-1, keepdims=True)
    var = jnp.mean((x - mean) ** 2, axis=-1, keepdims=True)
    xn = (x - mean) * jax.lax.rsqrt(var + EPS) * p["gamma"] + p["beta"]
    xm = xn * (1.0 + scale) + shift
    return xm @ p["w_lin"] + p["b_lin"]


if __name__ == "__main__":
    B, N, H, C = 2, 8, 32, 16
    key = jax.random.PRNGKey(0)
    kx, kc, kp = jax.random.split(key, 3)

    # bf16 activations (the kernel's I/O dtype); conditioning stays f32.
    x = jax.random.normal(kx, (B, N, H), jnp.float32).astype(jnp.bfloat16)
    c = jax.random.normal(kc, (B, 1, H), jnp.float32)
    params = init_params(kp, H, C)
    prepped = prepare_params(params)

    out = final_layer(x, c, prepped, out_channels=C)
    out = jax.block_until_ready(out)

    ref = reference(x, c, params)
    assert out.shape == (B, N, C)
    assert out.dtype == jnp.bfloat16
    # Tolerance accounts for bf16 activations/output and the bf16 MXU operands
    # (f32 accumulation); inference-grade accuracy.
    assert jnp.allclose(out.astype(jnp.float32), ref, atol=6e-2, rtol=6e-2)
    print("KERNEL_OK")
</pallas_src>

<mosaic_0001>
module attributes {stable_mosaic.version = 11 : i64} {
  func.func @_final_layer_kernel(%arg0: i32, %arg1: i32, %arg2: memref<1x8x32xbf16, #tpu.memory_space<vmem>>, %arg3: memref<1x1x32xf32, #tpu.memory_space<vmem>>, %arg4: memref<1x1x32xf32, #tpu.memory_space<vmem>>, %arg5: memref<32x128xbf16, #tpu.memory_space<vmem>>, %arg6: memref<1x128xf32, #tpu.memory_space<vmem>>, %arg7: memref<1x8x128xbf16, #tpu.memory_space<vmem>>) attributes {dimension_semantics = [#tpu.dimension_semantics<parallel>, #tpu.dimension_semantics<parallel>], iteration_bounds = array<i64: 2, 1>, scalar_prefetch = 0 : i64, scratch_operands = 0 : i64, tpu.core_type = #tpu.core_type<tc>, window_params = [{transform_indices = @transform_0, window_bounds = array<i64: 1, 8, 32>}, {transform_indices = @transform_1, window_bounds = array<i64: 1, 1, 32>}, {transform_indices = @transform_2, window_bounds = array<i64: 1, 1, 32>}, {pipeline_mode = #tpu.pipeline_mode<synchronous>, transform_indices = @transform_3, window_bounds = array<i64: 32, 128>}, {pipeline_mode = #tpu.pipeline_mode<synchronous>, transform_indices = @transform_4, window_bounds = array<i64: 1, 128>}, {transform_indices = @transform_5, window_bounds = array<i64: 1, 8, 128>}]} {
    %c0 = arith.constant 0 : index
    %c0_0 = arith.constant 0 : index
    %c0_1 = arith.constant 0 : index
    %0 = vector.load %arg2[%c0, %c0_0, %c0_1] : memref<1x8x32xbf16, #tpu.memory_space<vmem>>, vector<1x8x32xbf16>
    %1 = vector.shape_cast %0 : vector<1x8x32xbf16> to vector<8x32xbf16>
    %2 = arith.extf %1 : vector<8x32xbf16> to vector<8x32xf32>
    %cst = arith.constant dense<0.000000e+00> : vector<8xf32>
    %3 = vector.multi_reduction <add>, %2, %cst [1] : vector<8x32xf32> to vector<8xf32>
    %4 = vector.shape_cast %3 : vector<8xf32> to vector<8x1xf32>
    %cst_2 = arith.constant 3.125000e-02 : f32
    %5 = vector.broadcast %cst_2 : f32 to vector<8x1xf32>
    %6 = arith.mulf %4, %5 : vector<8x1xf32>
    %7 = arith.mulf %2, %2 : vector<8x32xf32>
    %cst_3 = arith.constant dense<0.000000e+00> : vector<8xf32>
    %8 = vector.multi_reduction <add>, %7, %cst_3 [1] : vector<8x32xf32> to vector<8xf32>
    %9 = vector.shape_cast %8 : vector<8xf32> to vector<8x1xf32>
    %cst_4 = arith.constant 3.125000e-02 : f32
    %10 = vector.broadcast %cst_4 : f32 to vector<8x1xf32>
    %11 = arith.mulf %9, %10 : vector<8x1xf32>
    %12 = arith.mulf %6, %6 : vector<8x1xf32>
    %13 = arith.subf %11, %12 : vector<8x1xf32>
    %cst_5 = arith.constant 0.000000e+00 : f32
    %14 = vector.broadcast %cst_5 : f32 to vector<8x1xf32>
    %15 = arith.maximumf %13, %14 : vector<8x1xf32>
    %cst_6 = arith.constant 9.99999997E-7 : f32
    %16 = vector.broadcast %cst_6 : f32 to vector<8x1xf32>
    %17 = arith.addf %15, %16 : vector<8x1xf32>
    %18 = math.rsqrt %17 : vector<8x1xf32>
    %19 = vector.broadcast %6 : vector<8x1xf32> to vector<8x32xf32>
    %20 = arith.subf %2, %19 : vector<8x32xf32>
    %c0_7 = arith.constant 0 : index
    %c0_8 = arith.constant 0 : index
    %c0_9 = arith.constant 0 : index
    %21 = vector.load %arg3[%c0_7, %c0_8, %c0_9] : memref<1x1x32xf32, #tpu.memory_space<vmem>>, vector<1x1x32xf32>
    %22 = vector.shape_cast %21 : vector<1x1x32xf32> to vector<1x32xf32>
    %23 = vector.broadcast %18 : vector<8x1xf32> to vector<8x32xf32>
    %24 = vector.broadcast %22 : vector<1x32xf32> to vector<8x32xf32>
    %25 = arith.mulf %23, %24 : vector<8x32xf32>
    %26 = arith.mulf %20, %25 : vector<8x32xf32>
    %c0_10 = arith.constant 0 : index
    %c0_11 = arith.constant 0 : index
    %c0_12 = arith.constant 0 : index
    %27 = vector.load %arg4[%c0_10, %c0_11, %c0_12] : memref<1x1x32xf32, #tpu.memory_space<vmem>>, vector<1x1x32xf32>
    %28 = vector.shape_cast %27 : vector<1x1x32xf32> to vector<1x32xf32>
    %29 = vector.broadcast %28 : vector<1x32xf32> to vector<8x32xf32>
    %30 = arith.addf %26, %29 : vector<8x32xf32>
    %31 = arith.truncf %30 : vector<8x32xf32> to vector<8x32xbf16>
    %c0_13 = arith.constant 0 : index
    %c0_14 = arith.constant 0 : index
    %32 = vector.load %arg5[%c0_13, %c0_14] : memref<32x128xbf16, #tpu.memory_space<vmem>>, vector<32x128xbf16>
    %cst_15 = arith.constant dense<0.000000e+00> : vector<8x128xf32>
    %33 = tpu.matmul %31, %32, %cst_15 {dimension_numbers = #tpu.dot_dimension_numbers<[1], [0], [0], [1], [0, 0, 1, 1], [], []>} : vector<8x32xbf16>, vector<32x128xbf16>, vector<8x128xf32> -> vector<8x128xf32>
    %c0_16 = arith.constant 0 : index
    %c0_17 = arith.constant 0 : index
    %34 = vector.load %arg6[%c0_16, %c0_17] : memref<1x128xf32, #tpu.memory_space<vmem>>, vector<1x128xf32>
    %35 = vector.broadcast %34 : vector<1x128xf32> to vector<8x128xf32>
    %36 = arith.addf %33, %35 : vector<8x128xf32>
    %37 = arith.truncf %36 : vector<8x128xf32> to vector<8x128xbf16>
    %c0_18 = arith.constant 0 : index
    %c0_19 = arith.constant 0 : index
    %c0_20 = arith.constant 0 : index
    %38 = vector.load %arg7[%c0_18, %c0_19, %c0_20] : memref<1x8x128xbf16, #tpu.memory_space<vmem>>, vector<1x8x128xbf16>
    %39 = vector.shape_cast %38 : vector<1x8x128xbf16> to vector<8x128xbf16>
    %40 = vector.shape_cast %37 : vector<8x128xbf16> to vector<1x8x128xbf16>
    tpu.vector_store %arg7[%c0_18, %c0_19, %c0_20], %40 {strides = array<i32>} : memref<1x8x128xbf16, #tpu.memory_space<vmem>>, vector<1x8x128xbf16>,
    return
  }
  func.func @transform_0(%arg0: i32, %arg1: i32) -> (i32, i32, i32) {
    %c0_i32 = arith.constant 0 : i32
    %c0_i32_0 = arith.constant 0 : i32
    return %arg0, %arg1, %c0_i32 : i32, i32, i32
  }
  func.func @transform_1(%arg0: i32, %arg1: i32) -> (i32, i32, i32) {
    %c0_i32 = arith.constant 0 : i32
    %c0_i32_0 = arith.constant 0 : i32
    %c0_i32_1 = arith.constant 0 : i32
    return %arg0, %c0_i32, %c0_i32_0 : i32, i32, i32
  }
  func.func @transform_2(%arg0: i32, %arg1: i32) -> (i32, i32, i32) {
    %c0_i32 = arith.constant 0 : i32
    %c0_i32_0 = arith.constant 0 : i32
    %c0_i32_1 = arith.constant 0 : i32
    return %arg0, %c0_i32, %c0_i32_0 : i32, i32, i32
  }
  func.func @transform_3(%arg0: i32, %arg1: i32) -> (i32, i32) {
    %c0_i32 = arith.constant 0 : i32
    %c0_i32_0 = arith.constant 0 : i32
    %c0_i32_1 = arith.constant 0 : i32
    return %c0_i32, %c0_i32_0 : i32, i32
  }
  func.func @transform_4(%arg0: i32, %arg1: i32) -> (i32, i32) {
    %c0_i32 = arith.constant 0 : i32
    %c0_i32_0 = arith.constant 0 : i32
    %c0_i32_1 = arith.constant 0 : i32
    return %c0_i32, %c0_i32_0 : i32, i32
  }
  func.func @transform_5(%arg0: i32, %arg1: i32) -> (i32, i32, i32) {
    %c0_i32 = arith.constant 0 : i32
    %c0_i32_0 = arith.constant 0 : i32
    return %arg0, %arg1, %c0_i32 : i32, i32, i32
  }
}

</mosaic_0001>

<llo_original>
// kernel: final_layer.1
$region0: #{final_layer.1}
  #allocation0 [shape = 'u32[]', space=smem, size = 0x4, offset = 0x4, fixed_abs, tag = 'smem constant byte address 0x4 - core index']
  #allocation1 [shape = 'u32[144,128]{1,0:T(1,128)}', space=vmem, size = 0x12000, scoped, tag = 'internal scratch']
  %s0 = inlined_call_operand.vmem [shape: bf16[2,8,32], index: 0, kind: input, shape index: {}]
  %s1 = inlined_call_operand.vmem [shape: f32[2,1,32], index: 1, kind: input, shape index: {}]
  %s2 = inlined_call_operand.vmem [shape: f32[2,1,32], index: 2, kind: input, shape index: {}]
  %s3 = inlined_call_operand.vmem [shape: bf16[32,128], index: 3, kind: input, shape index: {}]
  %s4 = inlined_call_operand.vmem [shape: f32[1,128], index: 4, kind: input, shape index: {}]
  %s5 = inlined_call_operand.hbm [shape: bf16[2,8,128], index: 5, kind: output, shape index: {}]
  %s6 = sld [smem:[#allocation0]]
  $region53: #{final_layer.1} parent=0
    _
  %s8 = ssub.s32 1, %s6
  %s9 = scalar_select 0, %s8, %s6
  $region1: #{final_layer.1} parent=0
    #allocation2 [shape = 'u8[4096]{0}', space=vmem, size = 0x1000, scoped, tag = 'output window, operand 0']
    #allocation3 [shape = 's32[2]{0}', space=sflag, size = 0x8, scoped, tag = 'scoped memory for final_layer.1']
    %10 = vsyncpa [#allocation3], 0
    %s11 = scalar_lea.sflag [#allocation3], 1
    %12 = vsyncpa %s11, 0
    loop: start=0, step=1, limit=4
    $region2: #{final_layer.1} parent=1 // loop_pre_header
      _
    $region3: #{final_layer.1} parent=1 // loop_header
      %s14 = sphi 0, %s18
      %p15 = scmp.ge.s32.totalorder %s14, 4
      %s21 = sphi 0, %s33
      %s22 = sphi 0, %s29
      %s23 = sphi 0, %s21
      %s24 = sphi 0, %s22
      %s25 = sphi 0, %s23
      %s26 = sphi 0, %s24
      %s38 = sphi 0, %s40
      %s41 = sphi 0, %s38
      %s42 = sphi 0, %s41
      %s58 = sphi 0, %s42
      %s64 = sphi 0, %s66
      %s67 = sphi 0, %s64
      %s68 = sphi 0, %s67
      %s84 = sphi 0, %s68
      %s90 = sphi 0, %s92
      %s93 = sphi 0, %s90
      %s94 = sphi 0, %s93
      %s110 = sphi 0, %s94
      %s114 = sphi 0, %s114
      %s116 = sphi 0, %s114
      %s117 = sphi 0, %s116
      %s131 = sphi 0, %s117
      %s135 = sphi 0, %s135
      %s137 = sphi 0, %s135
      %s138 = sphi 0, %s137
      %s152 = sphi 0, %s138
      %s160 = sphi 0, %s162
      %s163 = sphi 0, %s160
      %s164 = sphi 0, %s163
      %s180 = sphi 0, %s164
    $region4: #{final_layer.1} parent=1 // loop_header_branch
      %17 = sbr.rel (%p15) target = $region8
    $region5: #{final_layer.1} parent=1 // loop_body
      %s19 = ssub.s32 %s14, 1
      %s20 = ssub.s32 %s14, 2
      %s27 = sadd.s32 1, %s22
      %p28 = scmp.ge.s32.totalorder %s27, 1
      %s29 = scalar_select %p28, 0, %s27
      %s30 = sadd.s32 1, %s21
      %s31 = scalar_select %p28, %s30, %s21
      %p32 = scmp.ge.s32.totalorder %s31, 2
      %s33 = scalar_select %p32, 0, %s31
      %s34 = ssub.s32 %s21, %s33
      %s35 = ssub.s32 %s22, %s29
      %s36 = sor.u32 %s34, %s35
      %p37 = scmp.eq.s32.totalorder %s36, 0
      %s39 = sadd.s32 %s38, 1
      %s40 = scalar_select %p37, %s38, %s39
      %p43 = pneg %p37
      %p44 = scmp.eq.s32.totalorder %s14, 1
      %p45 = por %p43, %p44
      %p46 = scmp.ne.s32.totalorder %s38, %s41
      %p47 = scmp.eq.s32.totalorder %s14, 0
      %p48 = por %p46, %p47
      %p49 = scmp.ne.s32.totalorder %s38, %s41
      %p50 = scmp.eq.s32.totalorder %s19, 1
      %p51 = por %p49, %p50
      %p52 = scmp.ne.s32.totalorder %s41, %s42
      %p53 = scmp.eq.s32.totalorder %s19, 0
      %p54 = por %p52, %p53
      %p55 = scmp.ne.s32.totalorder %s41, %s42
      %p56 = scmp.eq.s32.totalorder %s20, 1
      %p57 = por %p55, %p56
      %p59 = scmp.ne.s32.totalorder %s42, %s58
      %p60 = scmp.eq.s32.totalorder %s20, 0
      %p61 = por %p59, %p60
      %s62 = ssub.s32 %s21, %s33
      %p63 = scmp.eq.s32.totalorder %s62, 0
      %s65 = sadd.s32 %s64, 1
      %s66 = scalar_select %p63, %s64, %s65
      %p69 = pneg %p63
      %p70 = scmp.eq.s32.totalorder %s14, 1
      %p71 = por %p69, %p70
      %p72 = scmp.ne.s32.totalorder %s64, %s67
      %p73 = scmp.eq.s32.totalorder %s14, 0
      %p74 = por %p72, %p73
      %p75 = scmp.ne.s32.totalorder %s64, %s67
      %p76 = scmp.eq.s32.totalorder %s19, 1
      %p77 = por %p75, %p76
      %p78 = scmp.ne.s32.totalorder %s67, %s68
      %p79 = scmp.eq.s32.totalorder %s19, 0
      %p80 = por %p78, %p79
      %p81 = scmp.ne.s32.totalorder %s67, %s68
      %p82 = scmp.eq.s32.totalorder %s20, 1
      %p83 = por %p81, %p82
      %p85 = scmp.ne.s32.totalorder %s68, %s84
      %p86 = scmp.eq.s32.totalorder %s20, 0
      %p87 = por %p85, %p86
      %s88 = ssub.s32 %s21, %s33
      %p89 = scmp.eq.s32.totalorder %s88, 0
      %s91 = sadd.s32 %s90, 1
      %s92 = scalar_select %p89, %s90, %s91
      %p95 = pneg %p89
      %p96 = scmp.eq.s32.totalorder %s14, 1
      %p97 = por %p95, %p96
      %p98 = scmp.ne.s32.totalorder %s90, %s93
      %p99 = scmp.eq.s32.totalorder %s14, 0
      %p100 = por %p98, %p99
      %p101 = scmp.ne.s32.totalorder %s90, %s93
      %p102 = scmp.eq.s32.totalorder %s19, 1
      %p103 = por %p101, %p102
      %p104 = scmp.ne.s32.totalorder %s93, %s94
      %p105 = scmp.eq.s32.totalorder %s19, 0
      %p106 = por %p104, %p105
      %p107 = scmp.ne.s32.totalorder %s93, %s94
      %p108 = scmp.eq.s32.totalorder %s20, 1
      %p109 = por %p107, %p108
      %p111 = scmp.ne.s32.totalorder %s94, %s110
      %p112 = scmp.eq.s32.totalorder %s20, 0
      %p113 = por %p111, %p112
      %s115 = sadd.s32 %s114, 1
      %p118 = scmp.eq.s32.totalorder %s14, 1
      %p119 = scmp.ne.s32.totalorder %s114, %s116
      %p120 = scmp.eq.s32.totalorder %s14, 0
      %p121 = por %p119, %p120
      %p122 = scmp.ne.s32.totalorder %s114, %s116
      %p123 = scmp.eq.s32.totalorder %s19, 1
      %p124 = por %p122, %p123
      %p125 = scmp.ne.s32.totalorder %s116, %s117
      %p126 = scmp.eq.s32.totalorder %s19, 0
      %p127 = por %p125, %p126
      %p128 = scmp.ne.s32.totalorder %s116, %s117
      %p129 = scmp.eq.s32.totalorder %s20, 1
      %p130 = por %p128, %p129
      %p132 = scmp.ne.s32.totalorder %s117, %s131
      %p133 = scmp.eq.s32.totalorder %s20, 0
      %p134 = por %p132, %p133
      %s136 = sadd.s32 %s135, 1
      %p139 = scmp.eq.s32.totalorder %s14, 1
      %p140 = scmp.ne.s32.totalorder %s135, %s137
      %p141 = scmp.eq.s32.totalorder %s14, 0
      %p142 = por %p140, %p141
      %p143 = scmp.ne.s32.totalorder %s135, %s137
      %p144 = scmp.eq.s32.totalorder %s19, 1
      %p145 = por %p143, %p144
      %p146 = scmp.ne.s32.totalorder %s137, %s138
      %p147 = scmp.eq.s32.totalorder %s19, 0
      %p148 = por %p146, %p147
      %p149 = scmp.ne.s32.totalorder %s137, %s138
      %p150 = scmp.eq.s32.totalorder %s20, 1
      %p151 = por %p149, %p150
      %p153 = scmp.ne.s32.totalorder %s138, %s152
      %p154 = scmp.eq.s32.totalorder %s20, 0
      %p155 = por %p153, %p154
      %s156 = ssub.s32 %s21, %s33
      %s157 = ssub.s32 %s22, %s29
      %s158 = sor.u32 %s156, %s157
      %p159 = scmp.eq.s32.totalorder %s158, 0
      %s161 = sadd.s32 %s160, 1
      %s162 = scalar_select %p159, %s160, %s161
      %p165 = pneg %p159
      %p166 = scmp.eq.s32.totalorder %s14, 1
      %p167 = por %p165, %p166
      %p168 = scmp.ne.s32.totalorder %s160, %s163
      %p169 = scmp.eq.s32.totalorder %s14, 0
      %p170 = por %p168, %p169
      %p171 = scmp.ne.s32.totalorder %s160, %s163
      %p172 = scmp.eq.s32.totalorder %s19, 1
      %p173 = por %p171, %p172
      %p174 = scmp.ne.s32.totalorder %s163, %s164
      %p175 = scmp.eq.s32.totalorder %s19, 0
      %p176 = por %p174, %p175
      %p177 = scmp.ne.s32.totalorder %s163, %s164
      %p178 = scmp.eq.s32.totalorder %s20, 1
      %p179 = por %p177, %p178
      %p181 = scmp.ne.s32.totalorder %s164, %s180
      %p182 = scmp.eq.s32.totalorder %s20, 0
      %p183 = por %p181, %p182
      %p184 = scmp.le.s32.totalorder 1, %s14
      %p185 = scmp.lt.s32.totalorder %s14, 3
      %p186 = pnand %p184, %p185
      %p187 = pneg %p186
      // Predicated region
      $region9: #{final_layer.1} parent=5 // pred_check
        _
      $region10: #{final_layer.1} parent=5 // pred_check_branch
        %189 = sbr.rel (%p186) target = $region12
      $region11: #{final_layer.1} parent=5 // pred_region
        %s190 = ssub.s32 %s14, 1
        // Predicated region
        $region13: #{final_layer.1} parent=11 // pred_check
          %p191 = pneg %p127
        $region14: #{final_layer.1} parent=11 // pred_check_branch
          %193 = sbr.rel (%p191) target = $region16
        $region15: #{final_layer.1} parent=11 // pred_region
          _
        $region16: #{final_layer.1} parent=11 // pred_fallthru
          _
        // Predicated region
        $region17: #{final_layer.1} parent=11 // pred_check
          %p194 = pneg %p148
        $region18: #{final_layer.1} parent=11 // pred_check_branch
          %196 = sbr.rel (%p194) target = $region20
        $region19: #{final_layer.1} parent=11 // pred_region
          _
        $region20: #{final_layer.1} parent=11 // pred_fallthru
          _
      $region12: #{final_layer.1} parent=5 // pred_fallthru
        _
      %p197 = scmp.lt.s32.totalorder %s14, 2
      // Predicated region
      $region21: #{final_layer.1} parent=5 // pred_check
        %p198 = pneg %p197
      $region22: #{final_layer.1} parent=5 // pred_check_branch
        %200 = sbr.rel (%p198) target = $region24
      $region23: #{final_layer.1} parent=5 // pred_region
        // Predicated region
        $region25: #{final_layer.1} parent=23 // pred_check
          %p201 = pneg %p48
        $region26: #{final_layer.1} parent=23 // pred_check_branch
          %203 = sbr.rel (%p201) target = $region28
        $region27: #{final_layer.1} parent=23 // pred_region
          %p204 = scmp.lt.s32.totalorder %s21, 1
          %s205 = scalar_select %p204, %s21, 1
          %p206 = scmp.lt.s32.totalorder %s22, 0
          %s207 = scalar_select %p206, %s22, 0
          %s208 = sadd.s32 %s207, %s205
          %s209 = smul.addr %s208, 4
          %s210 = scalar_lea.vmem %s0, %s209
        $region28: #{final_layer.1} parent=23 // pred_fallthru
          _
        // Predicated region
        $region29: #{final_layer.1} parent=23 // pred_check
          %p211 = pneg %p74
        $region30: #{final_layer.1} parent=23 // pred_check_branch
          %213 = sbr.rel (%p211) target = $region32
        $region31: #{final_layer.1} parent=23 // pred_region
          %p214 = scmp.lt.s32.totalorder %s21, 1
          %s215 = scalar_select %p214, %s21, 1
          %s216 = scalar_lea.vmem %s1, %s215
        $region32: #{final_layer.1} parent=23 // pred_fallthru
          _
        // Predicated region
        $region33: #{final_layer.1} parent=23 // pred_check
          %p217 = pneg %p100
        $region34: #{final_layer.1} parent=23 // pred_check_branch
          %219 = sbr.rel (%p217) target = $region36
        $region35: #{final_layer.1} parent=23 // pred_region
          %p220 = scmp.lt.s32.totalorder %s21, 1
          %s221 = scalar_select %p220, %s21, 1
          %s222 = scalar_lea.vmem %s2, %s221
        $region36: #{final_layer.1} parent=23 // pred_fallthru
          _
      $region24: #{final_layer.1} parent=5 // pred_fallthru
        _
      %p223 = scmp.le.s32.totalorder 1, %s14
      %p224 = scmp.lt.s32.totalorder %s14, 3
      %p225 = pnand %p223, %p224
      %p226 = pneg %p225
      // Predicated region
      $region37: #{final_layer.1} parent=5 // pred_check
        _
      $region38: #{final_layer.1} parent=5 // pred_check_branch
        %228 = sbr.rel (%p225) target = $region40
      $region39: #{final_layer.1} parent=5 // pred_region
        %s229 = ssub.s32 %s14, 1
        %p230 = scmp.lt.s32.totalorder %s23, 1
        %s231 = scalar_select %p230, %s23, 1
        %p232 = scmp.lt.s32.totalorder %s24, 0
        %s233 = scalar_select %p232, %s24, 0
        %s234 = sadd.s32 %s233, %s231
        %s235 = smul.addr %s234, 4
        %s236 = scalar_lea.vmem %s0, %s235
        %p237 = pneg %p54
        %p238 = pneg %p51
        %p239 = scmp.lt.s32.totalorder %s23, 1
        %s240 = scalar_select %p239, %s23, 1
        %s241 = scalar_lea.vmem %s1, %s240
        %p242 = pneg %p80
        %p243 = pneg %p77
        %p244 = scmp.lt.s32.totalorder %s23, 1
        %s245 = scalar_select %p244, %s23, 1
        %s246 = scalar_lea.vmem %s2, %s245
        %p247 = pneg %p106
        %p248 = pneg %p103
        %p249 = pneg %p127
        %p250 = pneg %p124
        %p251 = pneg %p148
        %p252 = pneg %p145
        %p253 = pneg %p176
        %p254 = pneg %p173
        %s255 = sand.u32 %s163, 1
        %s256 = scalar_lea.sflag [#allocation3], %s255
        %s257 = sand.u32 %s163, 1
        %s258 = smul.addr %s257, 4
        %s259 = scalar_lea.vmem [#allocation2], %s258
        %p260 = scmp.lt.s32.totalorder %s23, 1
        %s261 = scalar_select %p260, %s23, 1
        %p262 = scmp.lt.s32.totalorder %s24, 0
        %s263 = scalar_select %p262, %s24, 0
        %s264 = sadd.s32 %s263, %s261
        %s265 = smul.addr %s264, 4
        %s266 = scalar_lea.vmem %s0, %s265
        %p267 = scmp.lt.s32.totalorder %s23, 1
        %s268 = scalar_select %p267, %s23, 1
        %s269 = scalar_lea.vmem %s1, %s268
        %p270 = scmp.lt.s32.totalorder %s23, 1
        %s271 = scalar_select %p270, %s23, 1
        %s272 = scalar_lea.vmem %s2, %s271
        %v274 = vld [vmem:[%s266] sm:$0xf]
        %v275 = vunpack.c.l.bf16 %v274
        %vm276 = vcmask 261120
        %v277 = vsel %vm276, %v275, 0.0
        %278 = vadd.xlane.f32.xlu0 %v277
        %v279 = vpop.xlane.xlu0 %278
        %v280 = vmul.f32 %v279, 0.03125
        %v281 = vmul.f32 %v275, %v275
        %v282 = vsel %vm276, %v281, 0.0
        %283 = vadd.xlane.f32.xlu0 %v282
        %v284 = vpop.xlane.xlu0 %283
        %v285 = vmul.f32 %v284, 0.03125
        %v286 = vmul.f32 %v280, %v280
        %v287 = vsub.f32 %v285, %v286
        %v288 = vmax.f32 %v287, 0.0
        %v289 = vadd.f32 %v288, 1e-06
        %v290 = vrsqrt.pop %v289
        %v291 = vsub.f32 %v275, %v280
        %v292 = vld [vmem:[%s269] sm:$0x1]
        %v294 = vlaneseq
        %v295 = vshrl.u32 %v294, 7
        %v296 = vsub.s32 0, %v295
        %v297 = vrot.slane %v292, %v296
        %v299 = vmul.f32 %v290, %v297
        %v300 = vmul.f32 %v291, %v299
        %v301 = vld [vmem:[%s272] sm:$0x1]
        %v303 = vlaneseq
        %v304 = vshrl.u32 %v303, 7
        %v305 = vsub.s32 0, %v304
        %v306 = vrot.slane %v301, %v305
        %v308 = vadd.f32 %v300, %v306
        %v309 = vpack.c.bf16 %v308, %v308
        %v310 = vld [vmem:[%s3] sm:$0xf]
        %v311 = vld [vmem:[%s3 + $0x4] sm:$0xf]
        %v312 = vld [vmem:[%s3 + $0x8] sm:$0xf]
        %v313 = vld [vmem:[%s3 + $0xc] sm:$0xf]
        %v314 = vld [vmem:[%s4] sm:$0x1]
        %v316 = vlaneseq
        %v317 = vshrl.u32 %v316, 7
        %v318 = vsub.s32 0, %v317
        %v319 = vrot.slane %v314, %v318
        %v325 = vunpack.c.l.b16 %v310
        %v326 = vunpack.c.l.b16 %v311
        %v327 = vunpack.c.l.b16 %v312
        %v328 = vunpack.c.l.b16 %v313
        %v329 = vpack.c.b16 %v326, %v325
        %v330 = vpack.c.b16 %v328, %v327
        %v334 = vsel %vm276, %v309, 0
        %336 = vmatprep.subr.bf16.mxu0 0
        %337 = vmatpush1.bf16.msra.mxu0 %v329
        %338 = vmatprep.subr.bf16.mxu0 0
        %339 = vmatpush1.bf16.msra.mxu0 %v330
        %340 = vmatprep.subr.bf16.mxu0 0
        %341 = vmatpush1.bf16.msra.mxu0 0
        %342 = vmatprep.subr.bf16.mxu0 0
        %343 = vmatpush1.bf16.msra.mxu0 0
        %344 = vmatprep.subr.bf16.mxu0 0
        %345 = vmatpush1.bf16.msra.mxu0 0
        %346 = vmatprep.subr.bf16.mxu0 0
        %347 = vmatpush1.bf16.msra.mxu0 0
        %348 = vmatprep.subr.bf16.mxu0 0
        %349 = vmatpush1.bf16.msra.mxu0 0
        %350 = vmatprep.subr.bf16.mxu0 0
        %351 = vmatpush1.bf16.msra.mxu0 0
        %352 = vmatprep.subr.bf16.mxu0 0
        %353 = vmatpush1.bf16.msra.mxu0 0
        %354 = vmatprep.subr.bf16.mxu0 0
        %355 = vmatpush1.bf16.msra.mxu0 0
        %356 = vmatprep.subr.bf16.mxu0 0
        %357 = vmatpush1.bf16.msra.mxu0 0
        %358 = vmatprep.subr.bf16.mxu0 0
        %359 = vmatpush1.bf16.msra.mxu0 0
        %360 = vmatprep.subr.bf16.mxu0 0
        %361 = vmatpush1.bf16.msra.mxu0 0
        %362 = vmatprep.subr.bf16.mxu0 0
        %363 = vmatpush1.bf16.msra.mxu0 0
        %364 = vmatprep.subr.bf16.mxu0 0
        %365 = vmatpush1.bf16.msra.mxu0 0
        %366 = vmatprep.subr.bf16.mxu0 0
        %367 = vmatpush1.bf16.msra.mxu0 0
        %368 = vmatprep.mubr.bf16.mxu0 0
        %369 = vmatmul.mubr.bf16.gmra.mrb[0].mxu0 %v334
        %v370 = vpop.f32.mrb[0].mxu0
        %v371 = vadd.f32 %v319, %v370
        %v372 = vpop.f32.mrb[0].mxu0
        %v373 = vpop.f32.mrb[0].mxu0
        %v374 = vpop.f32.mrb[0].mxu0
        %375 = vdwg.mxu0
        %v376 = vpack.c.bf16 %v371, %v371
        %377 = vst [vmem:[%s259] sm:$0xf] %v376
        %s378 = sand.u32 %s163, 1
        %s379 = scalar_lea.sflag [#allocation3], %s378
        %s380 = sand.u32 %s163, 1
        %s381 = smul.addr %s380, 4
        %s382 = scalar_lea.vmem [#allocation2], %s381
        // Predicated region
        $region41: #{final_layer.1} parent=39 // pred_check
          %p383 = pneg %p173
        $region42: #{final_layer.1} parent=39 // pred_check_branch
          %385 = sbr.rel (%p383) target = $region44
        $region43: #{final_layer.1} parent=39 // pred_region
          %s387 = ssub.s32 64, 64
          %388 = vsyncadd %s379, %s387
          %s389 = sadd.s32 %s24, %s23
          %s390 = smul.addr %s389, 64
          %s391 = scalar_lea.hbm %s5, %s390
          %s393 = sshll.u32 %s382, 4
          %s394 = int_to_ptr.vmem [resolvable:$true] %s393
          %396 = dma.vmem_to_hbm [thread:$0]  %s394, 64, %s391, %s379
        $region44: #{final_layer.1} parent=39 // pred_fallthru
          _
      $region40: #{final_layer.1} parent=5 // pred_fallthru
        _
      %p397 = scmp.le.s32.totalorder 2, %s14
      // Predicated region
      $region45: #{final_layer.1} parent=5 // pred_check
        %p398 = pneg %p397
      $region46: #{final_layer.1} parent=5 // pred_check_branch
        %400 = sbr.rel (%p398) target = $region48
      $region47: #{final_layer.1} parent=5 // pred_region
        %s401 = ssub.s32 %s14, 2
        // Predicated region
        $region49: #{final_layer.1} parent=47 // pred_check
          %p402 = pneg %p179
        $region50: #{final_layer.1} parent=47 // pred_check_branch
          %404 = sbr.rel (%p402) target = $region52
        $region51: #{final_layer.1} parent=47 // pred_region
          %s405 = sand.u32 %s164, 1
          %s406 = scalar_lea.sflag [#allocation3], %s405
          %s407 = sand.u32 %s164, 1
          %s408 = smul.addr %s407, 4
          %s409 = scalar_lea.vmem [#allocation2], %s408
          %410 = dma.done %s406, 64
        $region52: #{final_layer.1} parent=47 // pred_fallthru
          _
      $region48: #{final_layer.1} parent=5 // pred_fallthru
        _
    $region6: #{final_layer.1} parent=1 // loop_footer
      %s18 = sadd.s32 1, %s14
    $region7: #{final_layer.1} parent=1 // loop_footer_branch
      %13 = sbr.rel target = $region3
    $region8: #{final_layer.1} parent=1 // loop_exit
      _
    %411 = vsyncpa [#allocation3], 1
    %s412 = scalar_lea.sflag [#allocation3], 1
    %413 = vsyncpa %s412, 1

</llo_original>
